<compile_context>
chip_gen: v5e
topology: v5e:2x2
jax: 0.10.0
libtpu: 0.0.40
codegen_flags: <defaults>
</compile_context>

<pallas_src>
import jax
import jax.numpy as jnp
from jax.experimental import pallas as pl
from jax.experimental.pallas import tpu as pltpu


def _round_up(x, m):
    return (x + m - 1) // m * m


def _weight_network_kernel(x_ref, wt_ref, b_ref, o_ref):
    # x_ref: (TB, C)   wt_ref: (C, C) pre-transposed to (in, out)   b_ref: (1, C)
    logits = jnp.dot(
        x_ref[...], wt_ref[...], preferred_element_type=jnp.float32
    ) + b_ref[...].astype(jnp.float32)

    # ReLU
    act = jnp.maximum(logits, 0.0)

    # Numerically stable softmax over the class axis (PyTorch dim=1).
    m = jnp.max(act, axis=-1, keepdims=True)
    e = jnp.exp(act - m)
    denom = jnp.sum(e, axis=-1, keepdims=True)
    o_ref[...] = (e / denom).astype(o_ref.dtype)   # exact division (cheap: 1/row)


def weight_network_forward(residual, weight, bias, *, block_rows=8192):
    """residual: (B, C); weight: (C, C) PyTorch (out, in) layout; bias: (C,)."""
    B, C = residual.shape
    assert weight.shape == (C, C) and bias.shape == (C,)

    # One-time parameter prep (would be cached as model state in real use):
    # transpose to (in, out) so the kernel contraction needs no per-step
    # transpose, and make the bias a 2-D row for VMEM.
    w_t = jnp.transpose(weight)        # (in, out)
    b_row = bias.reshape(1, C)

    # Batch tile: multiple of 8 sublanes; large by default to amortize
    # per-grid-step overhead.  No padding of B: Pallas masks the partial tile.
    TB = _round_up(min(block_rows, B), 8)
    grid = (pl.cdiv(B, TB),)

    return pl.pallas_call(
        _weight_network_kernel,
        out_shape=jax.ShapeDtypeStruct((B, C), residual.dtype),
        grid=grid,
        in_specs=[
            pl.BlockSpec((TB, C), lambda i: (i, 0)),   # batch-tiled activations
            pl.BlockSpec((C, C), lambda i: (0, 0)),    # weight resident in VMEM
            pl.BlockSpec((1, C), lambda i: (0, 0)),    # bias resident in VMEM
        ],
        out_specs=pl.BlockSpec((TB, C), lambda i: (i, 0)),
        compiler_params=pltpu.CompilerParams(
            dimension_semantics=("parallel",),       # shard batch tiles across TCs
            vmem_limit_bytes=32 * 1024 * 1024,       # headroom on v5e; safe on v7x
        ),
    )(residual, w_t, b_row)


def reference_forward(residual, weight, bias):
    logits = residual @ weight.T + bias
    act = jnp.maximum(logits, 0.0)
    return jax.nn.softmax(act, axis=1)


if __name__ == "__main__":
    num_classes = 16
    batch = 8

    key = jax.random.PRNGKey(0)
    k_x, k_w, k_x2 = jax.random.split(key, 3)

    # Deterministic parameter init matching nn.init.normal_(weight, 0, 0.01),
    # nn.init.constant_(bias, 0)
    weight = 0.01 * jax.random.normal(
        k_w, (num_classes, num_classes), dtype=jnp.float32)
    bias = jnp.zeros((num_classes,), dtype=jnp.float32)

    residual = jax.random.normal(k_x, (batch, num_classes), dtype=jnp.float32)

    out = jax.block_until_ready(weight_network_forward(residual, weight, bias))
    ref = reference_forward(residual, weight, bias)
    assert out.shape == (batch, num_classes)
    assert jnp.allclose(out, ref, atol=1e-4, rtol=1e-4), "mismatch vs reference"
    assert jnp.allclose(jnp.sum(out, axis=1), 1.0, atol=1e-4)

    # Multi-tile + ragged path: batch not a multiple of the tile; exercises the
    # grid, partial-block masking, and resident-weight reuse across tiles.
    batch2 = 300
    residual2 = jax.random.normal(k_x2, (batch2, num_classes), dtype=jnp.float32)
    out2 = jax.block_until_ready(
        weight_network_forward(residual2, weight, bias, block_rows=128))
    ref2 = reference_forward(residual2, weight, bias)
    assert out2.shape == (batch2, num_classes)
    assert jnp.allclose(out2, ref2, atol=1e-4, rtol=1e-4), "mismatch (tiled path)"

    print("KERNEL_OK")
</pallas_src>

<mosaic_0001>
module attributes {stable_mosaic.version = 11 : i64} {
  func.func @_weight_network_kernel(%arg0: i32, %arg1: memref<8x16xf32, #tpu.memory_space<vmem>>, %arg2: memref<16x16xf32, #tpu.memory_space<vmem>>, %arg3: memref<1x16xf32, #tpu.memory_space<vmem>>, %arg4: memref<8x16xf32, #tpu.memory_space<vmem>>) attributes {dimension_semantics = [#tpu.dimension_semantics<parallel>], iteration_bounds = array<i64: 1>, scalar_prefetch = 0 : i64, scratch_operands = 0 : i64, tpu.core_type = #tpu.core_type<tc>, window_params = [{transform_indices = @transform_0, window_bounds = array<i64: 8, 16>}, {pipeline_mode = #tpu.pipeline_mode<synchronous>, transform_indices = @transform_1, window_bounds = array<i64: 16, 16>}, {pipeline_mode = #tpu.pipeline_mode<synchronous>, transform_indices = @transform_2, window_bounds = array<i64: 1, 16>}, {transform_indices = @transform_3, window_bounds = array<i64: 8, 16>}]} {
    %c0 = arith.constant 0 : index
    %c0_0 = arith.constant 0 : index
    %0 = vector.load %arg1[%c0, %c0_0] : memref<8x16xf32, #tpu.memory_space<vmem>>, vector<8x16xf32>
    %c0_1 = arith.constant 0 : index
    %c0_2 = arith.constant 0 : index
    %1 = vector.load %arg2[%c0_1, %c0_2] : memref<16x16xf32, #tpu.memory_space<vmem>>, vector<16x16xf32>
    %cst = arith.constant dense<0.000000e+00> : vector<8x16xf32>
    %2 = tpu.matmul %0, %1, %cst {dimension_numbers = #tpu.dot_dimension_numbers<[1], [0], [0], [1], [0, 0, 1, 1], [], []>} : vector<8x16xf32>, vector<16x16xf32>, vector<8x16xf32> -> vector<8x16xf32>
    %c0_3 = arith.constant 0 : index
    %c0_4 = arith.constant 0 : index
    %3 = vector.load %arg3[%c0_3, %c0_4] : memref<1x16xf32, #tpu.memory_space<vmem>>, vector<1x16xf32>
    %4 = vector.broadcast %3 : vector<1x16xf32> to vector<8x16xf32>
    %5 = arith.addf %2, %4 : vector<8x16xf32>
    %cst_5 = arith.constant 0.000000e+00 : f32
    %6 = vector.broadcast %cst_5 : f32 to vector<8x16xf32>
    %7 = arith.maximumf %5, %6 : vector<8x16xf32>
    %cst_6 = arith.constant dense<0xFF800000> : vector<8xf32>
    %8 = vector.multi_reduction <maximumf>, %7, %cst_6 [1] : vector<8x16xf32> to vector<8xf32>
    %9 = vector.shape_cast %8 : vector<8xf32> to vector<8x1xf32>
    %10 = vector.broadcast %9 : vector<8x1xf32> to vector<8x16xf32>
    %11 = arith.subf %7, %10 : vector<8x16xf32>
    %12 = math.exp %11 : vector<8x16xf32>
    %cst_7 = arith.constant dense<0.000000e+00> : vector<8xf32>
    %13 = vector.multi_reduction <add>, %12, %cst_7 [1] : vector<8x16xf32> to vector<8xf32>
    %14 = vector.shape_cast %13 : vector<8xf32> to vector<8x1xf32>
    %15 = vector.broadcast %14 : vector<8x1xf32> to vector<8x16xf32>
    %16 = arith.divf %12, %15 : vector<8x16xf32>
    %c0_8 = arith.constant 0 : index
    %c0_9 = arith.constant 0 : index
    %17 = vector.load %arg4[%c0_8, %c0_9] : memref<8x16xf32, #tpu.memory_space<vmem>>, vector<8x16xf32>
    tpu.vector_store %arg4[%c0_8, %c0_9], %16 {strides = array<i32>} : memref<8x16xf32, #tpu.memory_space<vmem>>, vector<8x16xf32>,
    return
  }
  func.func @transform_0(%arg0: i32) -> (i32, i32) {
    %c0_i32 = arith.constant 0 : i32
    %c0_i32_0 = arith.constant 0 : i32
    return %arg0, %c0_i32 : i32, i32
  }
  func.func @transform_1(%arg0: i32) -> (i32, i32) {
    %c0_i32 = arith.constant 0 : i32
    %c0_i32_0 = arith.constant 0 : i32
    %c0_i32_1 = arith.constant 0 : i32
    return %c0_i32, %c0_i32_0 : i32, i32
  }
  func.func @transform_2(%arg0: i32) -> (i32, i32) {
    %c0_i32 = arith.constant 0 : i32
    %c0_i32_0 = arith.constant 0 : i32
    %c0_i32_1 = arith.constant 0 : i32
    return %c0_i32, %c0_i32_0 : i32, i32
  }
  func.func @transform_3(%arg0: i32) -> (i32, i32) {
    %c0_i32 = arith.constant 0 : i32
    %c0_i32_0 = arith.constant 0 : i32
    return %arg0, %c0_i32 : i32, i32
  }
}

</mosaic_0001>

<llo_original>
// kernel: tpu_custom_call.1
$region0: #{tpu_custom_call.1}
  #allocation0 [shape = 'u32[]', space=smem, size = 0x4, offset = 0x4, fixed_abs, tag = 'smem constant byte address 0x4 - core index']
  #allocation1 [shape = 'u32[72,128]{1,0:T(1,128)}', space=vmem, size = 0x9000, scoped, tag = 'internal scratch']
  %s0 = inlined_call_operand.hbm [shape: f32[8,16], index: 0, kind: input, shape index: {}]
  %s1 = inlined_call_operand.hbm [shape: f32[16,16], index: 1, kind: input, shape index: {}]
  %s2 = inlined_call_operand.vmem [shape: f32[1,16], index: 2, kind: input, shape index: {}]
  %s3 = inlined_call_operand.hbm [shape: f32[8,16], index: 3, kind: output, shape index: {}]
  %s4 = sld [smem:[#allocation0]]
  $region30: #{tpu_custom_call.1} parent=0
    _
  %s6 = ssub.s32 1, %s4
  %s7 = scalar_select 0, %s6, %s4
  $region1: #{tpu_custom_call.1} parent=0
    #allocation2 [shape = 'u8[4096]{0}', space=vmem, size = 0x1000, scoped, tag = 'input window, operand 0, single buffered']
    #allocation3 [shape = 's32[1]{0}', space=sflag, size = 0x4, scoped, tag = 'scoped memory for tpu_custom_call.1']
    #allocation4 [shape = 's32[1]{0}', space=sflag, size = 0x4, scoped, tag = 'scoped memory for tpu_custom_call.1']
    #allocation5 [shape = 'u8[8192]{0}', space=vmem, size = 0x2000, scoped, tag = 'input window, operand 1, single buffered']
    #allocation6 [shape = 's32[1]{0}', space=sflag, size = 0x4, scoped, tag = 'scoped memory for tpu_custom_call.1']
    #allocation7 [shape = 'u8[4096]{0}', space=vmem, size = 0x1000, scoped, tag = 'output window, operand 0, single buffered']
    %8 = vsyncpa [#allocation3], 0
    %9 = vsyncpa [#allocation6], 0
    %10 = vsyncpa [#allocation4], 0
    // Predicated region
    $region2: #{tpu_custom_call.1} parent=1 // pred_check
      _
    $region3: #{tpu_custom_call.1} parent=1 // pred_check_branch
      %12 = sbr.rel (0) target = $region5
    $region4: #{tpu_custom_call.1} parent=1 // pred_region
      %14 = vsyncadd [#allocation3], 0
      %s16 = sshll.u32 %s0, 4
      %s17 = int_to_ptr.hbm [resolvable:$true] %s16
      %s18 = sshll.u32 [#allocation2], 4
      %s19 = int_to_ptr.vmem [resolvable:$true] %s18
      %21 = dma.hbm_to_vmem [thread:$0]  %s17, 128, %s19, [#allocation3]
    $region5: #{tpu_custom_call.1} parent=1 // pred_fallthru
      _
    // Predicated region
    $region6: #{tpu_custom_call.1} parent=1 // pred_check
      _
    $region7: #{tpu_custom_call.1} parent=1 // pred_check_branch
      %23 = sbr.rel (0) target = $region9
    $region8: #{tpu_custom_call.1} parent=1 // pred_region
      %25 = vsyncadd [#allocation6], 0
      %s26 = sshll.u32 %s1, 4
      %s27 = int_to_ptr.hbm [resolvable:$true] %s26
      %s28 = sshll.u32 [#allocation5], 4
      %s29 = int_to_ptr.vmem [resolvable:$true] %s28
      %34 = dma.hbm_to_vmem [thread:$0]  %s27, 256, %s29, [#allocation6], 128, 128, 8
    $region9: #{tpu_custom_call.1} parent=1 // pred_fallthru
      _
    // Predicated region
    $region10: #{tpu_custom_call.1} parent=1 // pred_check
      _
    $region11: #{tpu_custom_call.1} parent=1 // pred_check_branch
      %36 = sbr.rel (0) target = $region13
    $region12: #{tpu_custom_call.1} parent=1 // pred_region
      _
    $region13: #{tpu_custom_call.1} parent=1 // pred_fallthru
      _
    // Predicated region
    $region14: #{tpu_custom_call.1} parent=1 // pred_check
      _
    $region15: #{tpu_custom_call.1} parent=1 // pred_check_branch
      %38 = sbr.rel (0) target = $region17
    $region16: #{tpu_custom_call.1} parent=1 // pred_region
      %40 = dma.done [#allocation3], 128
    $region17: #{tpu_custom_call.1} parent=1 // pred_fallthru
      _
    // Predicated region
    $region18: #{tpu_custom_call.1} parent=1 // pred_check
      _
    $region19: #{tpu_custom_call.1} parent=1 // pred_check_branch
      %42 = sbr.rel (0) target = $region21
    $region20: #{tpu_custom_call.1} parent=1 // pred_region
      %44 = dma.done [#allocation6], 256
    $region21: #{tpu_custom_call.1} parent=1 // pred_fallthru
      _
    %v45 = vld [vmem:[#allocation2] sm:$0xff]
    %v46 = vld [vmem:[#allocation5] sm:$0xff]
    %v47 = vld [vmem:[#allocation5 + $0x8] sm:$0xff]
    %v48 = vld [vmem:[%s2] sm:$0x1]
    %v50 = vperm.slane %v48, 0
    %vm52 = vcmask 130048
    %v54 = vsel %vm52, %v45, 0
    %56 = vmatpush.msra.mxu0 0.0
    %57 = vmatpush.msra.mxu0 0.0
    %58 = vmatpush.msra.mxu0 0.0
    %59 = vmatpush.msra.mxu0 0.0
    %60 = vmatpush.msra.mxu0 0.0
    %61 = vmatpush.msra.mxu0 0.0
    %62 = vmatpush.msra.mxu0 0.0
    %63 = vmatpush.msra.mxu0 0.0
    %64 = vmatpush.msra.mxu0 0.0
    %65 = vmatpush.msra.mxu0 0.0
    %66 = vmatpush.msra.mxu0 0.0
    %67 = vmatpush.msra.mxu0 0.0
    %68 = vmatpush.msra.mxu0 0.0
    %69 = vmatpush.msra.mxu0 0.0
    %70 = vmatpush.msra.mxu0 %v47
    %71 = vmatpush.msra.mxu0 %v46
    %72 = vmatmul.f32.gmra.mxu0 %v54
    %v73 = vpop.f32.mrf.mxu0
    %v74 = vadd.f32 %v50, %v73
    %75 = vdwg.mxu0
    %v76 = vmax.f32 %v74, 0.0
    %v77 = vsel %vm52, %v76, -inf
    %78 = vmax.xlane.f32.xlu0 %v77
    %v79 = vpop.xlane.xlu0 %78
    %v80 = vsub.f32 %v76, %v79
    %v81 = vmul.f32 %v80, 1.442695
    %v82 = vpow.pop %v81
    %v83 = vsel %vm52, %v82, 0.0
    %84 = vadd.xlane.f32.xlu0 %v83
    %v85 = vpop.xlane.xlu0 %84
    %v86 = vrcp.pop %v85
    %v87 = vmul.f32 %v85, %v86
    %v88 = vsub.f32 1.0, %v87
    %v89 = vmul.f32 %v86, %v88
    %v90 = vadd.f32 %v86, %v89
    %vm91 = vweird.f32 %v85
    %vm92 = vweird.f32 %v86
    %vm93 = vmor %vm91, %vm92
    %v94 = vsel %vm93, %v86, %v90
    %v95 = vand.u32 2147483647, %v85
    %vm96 = vcmp.eq.f32.partialorder %v95, 8.507059e+37
    %v97 = vand.u32 %v85, 2147483648
    %v98 = vor.u32 1.1754944e-38, %v97
    %v99 = vsel %vm96, %v98, %v94
    %v100 = vmul.f32 %v82, %v99
    %101 = vst.msk [vmem:[#allocation7] sm:$0xff] %vm52, %v100
    // Predicated region
    $region22: #{tpu_custom_call.1} parent=1 // pred_check
      _
    $region23: #{tpu_custom_call.1} parent=1 // pred_check_branch
      %103 = sbr.rel (0) target = $region25
    $region24: #{tpu_custom_call.1} parent=1 // pred_region
      %105 = vsyncadd [#allocation4], 0
      %s107 = sshll.u32 [#allocation7], 4
      %s108 = int_to_ptr.vmem [resolvable:$true] %s107
      %s109 = sshll.u32 %s3, 4
      %s110 = int_to_ptr.hbm [resolvable:$true] %s109
      %112 = dma.vmem_to_hbm [thread:$0]  %s108, 128, %s110, [#allocation4]
    $region25: #{tpu_custom_call.1} parent=1 // pred_fallthru
      _
    // Predicated region
    $region26: #{tpu_custom_call.1} parent=1 // pred_check
      _
    $region27: #{tpu_custom_call.1} parent=1 // pred_check_branch
      %114 = sbr.rel (0) target = $region29
    $region28: #{tpu_custom_call.1} parent=1 // pred_region
      %116 = dma.done [#allocation4], 128
    $region29: #{tpu_custom_call.1} parent=1 // pred_fallthru
      _
    %117 = vsyncpa [#allocation3], 1
    %118 = vsyncpa [#allocation6], 1
    %119 = vsyncpa [#allocation4], 1

</llo_original>
